<compile_context>
chip_gen: v5e
topology: v5e:2x2
jax: 0.10.0
libtpu: 0.0.40
codegen_flags: <defaults>
</compile_context>

<pallas_src>
import jax
import jax.numpy as jnp
from jax import lax
from jax.experimental import pallas as pl
from jax.experimental.pallas import tpu as pltpu

KH = KW = 3          # conv kernel size
C_IN = 1
C_OUT = 3
LANES = 128          # f32 lane width of a vreg row


def conv_tanh_kernel(w_ref, b_ref, x_ref, o_ref):
    """One grid step = one batch element n; all C_OUT channels computed here.

    w_ref : SMEM, flat (C_OUT*KH*KW,) conv weights  (scalar prefetch)
    b_ref : SMEM, (C_OUT,) bias                     (scalar prefetch)
    x_ref : VMEM, (1, 1, H, W) raw (unpadded) input image for batch n
    o_ref : VMEM, (1, C_OUT, H, W) output tile for batch n
    """
    H = o_ref.shape[-2]
    W = o_ref.shape[-1]

    x = x_ref[0, 0, :, :].astype(jnp.float32)          # (H, W)

    # Zero-pad entirely inside VMEM (no wrapper jnp.pad => no extra HBM
    # round trip).  Width is padded up to a full 128-lane row so the
    # kx-shifted windows below stay inside one aligned lane tile.
    rpad = 1 + ((-(W + 2)) % LANES)                    # right zero columns
    left = jnp.zeros((H, 1), jnp.float32)
    right = jnp.zeros((H, rpad), jnp.float32)
    xp = jnp.concatenate([left, x, right], axis=1)     # (H, W+1+rpad)
    zrow = jnp.zeros((1, xp.shape[1]), jnp.float32)
    xp = jnp.concatenate([zrow, xp, zrow], axis=0)     # (H+2, W+1+rpad)

    # 3x3 conv as 9 shifted-window MACs; each window is reused for all three
    # output channels.  MACs run on the VPU; tanh goes to the EUP slot.
    accs = [jnp.zeros((H, W), jnp.float32) for _ in range(C_OUT)]
    for ky in range(KH):
        for kx in range(KW):
            win = xp[ky:ky + H, kx:kx + W]             # (H, W) shifted window
            for co in range(C_OUT):
                wv = w_ref[co * (KH * KW) + ky * KW + kx]
                accs[co] = accs[co] + wv * win

    for co in range(C_OUT):
        o_ref[0, co, :, :] = jnp.tanh(accs[co] + b_ref[co])


def conv2d_tanh(x, weight, bias):
    """x: (N, 1, H, W) f32; weight: (C_OUT, 1, 3, 3); bias: (C_OUT,)."""
    N, C, H, W = x.shape
    assert C == C_IN
    w_flat = weight.reshape(-1).astype(jnp.float32)     # (C_OUT*9,) -> SMEM
    b = bias.astype(jnp.float32)                        # (C_OUT,)   -> SMEM

    return pl.pallas_call(
        conv_tanh_kernel,
        out_shape=jax.ShapeDtypeStruct((N, C_OUT, H, W), jnp.float32),
        grid_spec=pltpu.PrefetchScalarGridSpec(
            num_scalar_prefetch=2,            # w_flat, bias -> SMEM
            grid=(N,),                        # one step per batch element
            in_specs=[
                pl.BlockSpec((1, 1, H, W),
                             lambda n, w, b: (n, 0, 0, 0)),
            ],
            out_specs=pl.BlockSpec((1, C_OUT, H, W),
                                   lambda n, w, b: (n, 0, 0, 0)),
        ),
        compiler_params=pltpu.CompilerParams(
            dimension_semantics=("parallel",)),
    )(w_flat, b, x)


def reference(x, weight, bias):
    y = lax.conv_general_dilated(
        x, weight, window_strides=(1, 1), padding=((1, 1), (1, 1)),
        dimension_numbers=("NCHW", "OIHW", "NCHW"))
    return jnp.tanh(y + bias[None, :, None, None])


if __name__ == "__main__":
    key = jax.random.PRNGKey(0)
    kx, kw, kb = jax.random.split(key, 3)

    # Deterministic synthetic parameters (Conv2d(1, 3, 3) shapes).
    fan_in = C_IN * KH * KW
    bound = 1.0 / (fan_in ** 0.5)
    weight = jax.random.uniform(kw, (C_OUT, C_IN, KH, KW),
                                jnp.float32, -bound, bound)
    bias = jax.random.uniform(kb, (C_OUT,), jnp.float32, -bound, bound)

    # Input matching the module's x = torch.randn(1, 1, 64, 64).
    x = jax.random.normal(kx, (1, 1, 64, 64), jnp.float32)

    out = jax.block_until_ready(conv2d_tanh(x, weight, bias))

    ref = jax.block_until_ready(reference(x, weight, bias))
    assert out.shape == (1, C_OUT, 64, 64)
    assert jnp.allclose(out, ref, atol=1e-5, rtol=1e-5)

    print("KERNEL_OK")
</pallas_src>

<mosaic_0001>
module attributes {stable_mosaic.version = 11 : i64} {
  func.func @conv_tanh_kernel(%arg0: i32, %arg1: memref<27xf32, #tpu.memory_space<smem>>, %arg2: memref<3xf32, #tpu.memory_space<smem>>, %arg3: memref<1x1x64x64xf32, #tpu.memory_space<vmem>>, %arg4: memref<1x3x64x64xf32, #tpu.memory_space<vmem>>) attributes {dimension_semantics = [#tpu.dimension_semantics<parallel>], iteration_bounds = array<i64: 1>, scalar_prefetch = 2 : i64, scratch_operands = 0 : i64, tpu.core_type = #tpu.core_type<tc>, window_params = [{transform_indices = @transform_0, window_bounds = array<i64: 1, 1, 64, 64>}, {transform_indices = @transform_1, window_bounds = array<i64: 1, 3, 64, 64>}]} {
    %c0 = arith.constant 0 : index
    %c0_0 = arith.constant 0 : index
    %c0_1 = arith.constant 0 : index
    %c0_2 = arith.constant 0 : index
    %0 = vector.load %arg3[%c0, %c0_0, %c0_1, %c0_2] : memref<1x1x64x64xf32, #tpu.memory_space<vmem>>, vector<1x1x64x64xf32>
    %1 = vector.shape_cast %0 : vector<1x1x64x64xf32> to vector<64x64xf32>
    %cst = arith.constant 0.000000e+00 : f32
    %2 = vector.broadcast %cst : f32 to vector<64x1xf32>
    %cst_3 = arith.constant 0.000000e+00 : f32
    %3 = vector.broadcast %cst_3 : f32 to vector<64x63xf32>
    %4 = tpu.concatenate %2, %1, %3 in 1 : vector<64x1xf32>, vector<64x64xf32>, vector<64x63xf32> -> vector<64x128xf32>
    %cst_4 = arith.constant 0.000000e+00 : f32
    %5 = vector.broadcast %cst_4 : f32 to vector<1x128xf32>
    %6 = tpu.concatenate %5, %4, %5 in 0 : vector<1x128xf32>, vector<64x128xf32>, vector<1x128xf32> -> vector<66x128xf32>
    %cst_5 = arith.constant 0.000000e+00 : f32
    %7 = vector.broadcast %cst_5 : f32 to vector<64x64xf32>
    %cst_6 = arith.constant 0.000000e+00 : f32
    %8 = vector.broadcast %cst_6 : f32 to vector<64x64xf32>
    %cst_7 = arith.constant 0.000000e+00 : f32
    %9 = vector.broadcast %cst_7 : f32 to vector<64x64xf32>
    %10 = vector.extract_strided_slice %6 {offsets = [0, 0], sizes = [64, 64], strides = [1, 1]} : vector<66x128xf32> to vector<64x64xf32>
    %c0_8 = arith.constant 0 : index
    %11 = memref.load %arg1[%c0_8] : memref<27xf32, #tpu.memory_space<smem>>
    %12 = vector.broadcast %11 : f32 to vector<64x64xf32>
    %13 = arith.mulf %12, %10 : vector<64x64xf32>
    %14 = arith.addf %7, %13 : vector<64x64xf32>
    %c9 = arith.constant 9 : index
    %15 = memref.load %arg1[%c9] : memref<27xf32, #tpu.memory_space<smem>>
    %16 = vector.broadcast %15 : f32 to vector<64x64xf32>
    %17 = arith.mulf %16, %10 : vector<64x64xf32>
    %18 = arith.addf %8, %17 : vector<64x64xf32>
    %c18 = arith.constant 18 : index
    %19 = memref.load %arg1[%c18] : memref<27xf32, #tpu.memory_space<smem>>
    %20 = vector.broadcast %19 : f32 to vector<64x64xf32>
    %21 = arith.mulf %20, %10 : vector<64x64xf32>
    %22 = arith.addf %9, %21 : vector<64x64xf32>
    %23 = vector.extract_strided_slice %6 {offsets = [0, 1], sizes = [64, 64], strides = [1, 1]} : vector<66x128xf32> to vector<64x64xf32>
    %c1 = arith.constant 1 : index
    %24 = memref.load %arg1[%c1] : memref<27xf32, #tpu.memory_space<smem>>
    %25 = vector.broadcast %24 : f32 to vector<64x64xf32>
    %26 = arith.mulf %25, %23 : vector<64x64xf32>
    %27 = arith.addf %14, %26 : vector<64x64xf32>
    %c10 = arith.constant 10 : index
    %28 = memref.load %arg1[%c10] : memref<27xf32, #tpu.memory_space<smem>>
    %29 = vector.broadcast %28 : f32 to vector<64x64xf32>
    %30 = arith.mulf %29, %23 : vector<64x64xf32>
    %31 = arith.addf %18, %30 : vector<64x64xf32>
    %c19 = arith.constant 19 : index
    %32 = memref.load %arg1[%c19] : memref<27xf32, #tpu.memory_space<smem>>
    %33 = vector.broadcast %32 : f32 to vector<64x64xf32>
    %34 = arith.mulf %33, %23 : vector<64x64xf32>
    %35 = arith.addf %22, %34 : vector<64x64xf32>
    %36 = vector.extract_strided_slice %6 {offsets = [0, 2], sizes = [64, 64], strides = [1, 1]} : vector<66x128xf32> to vector<64x64xf32>
    %c2 = arith.constant 2 : index
    %37 = memref.load %arg1[%c2] : memref<27xf32, #tpu.memory_space<smem>>
    %38 = vector.broadcast %37 : f32 to vector<64x64xf32>
    %39 = arith.mulf %38, %36 : vector<64x64xf32>
    %40 = arith.addf %27, %39 : vector<64x64xf32>
    %c11 = arith.constant 11 : index
    %41 = memref.load %arg1[%c11] : memref<27xf32, #tpu.memory_space<smem>>
    %42 = vector.broadcast %41 : f32 to vector<64x64xf32>
    %43 = arith.mulf %42, %36 : vector<64x64xf32>
    %44 = arith.addf %31, %43 : vector<64x64xf32>
    %c20 = arith.constant 20 : index
    %45 = memref.load %arg1[%c20] : memref<27xf32, #tpu.memory_space<smem>>
    %46 = vector.broadcast %45 : f32 to vector<64x64xf32>
    %47 = arith.mulf %46, %36 : vector<64x64xf32>
    %48 = arith.addf %35, %47 : vector<64x64xf32>
    %49 = vector.extract_strided_slice %6 {offsets = [1, 0], sizes = [64, 64], strides = [1, 1]} : vector<66x128xf32> to vector<64x64xf32>
    %c3 = arith.constant 3 : index
    %50 = memref.load %arg1[%c3] : memref<27xf32, #tpu.memory_space<smem>>
    %51 = vector.broadcast %50 : f32 to vector<64x64xf32>
    %52 = arith.mulf %51, %49 : vector<64x64xf32>
    %53 = arith.addf %40, %52 : vector<64x64xf32>
    %c12 = arith.constant 12 : index
    %54 = memref.load %arg1[%c12] : memref<27xf32, #tpu.memory_space<smem>>
    %55 = vector.broadcast %54 : f32 to vector<64x64xf32>
    %56 = arith.mulf %55, %49 : vector<64x64xf32>
    %57 = arith.addf %44, %56 : vector<64x64xf32>
    %c21 = arith.constant 21 : index
    %58 = memref.load %arg1[%c21] : memref<27xf32, #tpu.memory_space<smem>>
    %59 = vector.broadcast %58 : f32 to vector<64x64xf32>
    %60 = arith.mulf %59, %49 : vector<64x64xf32>
    %61 = arith.addf %48, %60 : vector<64x64xf32>
    %62 = vector.extract_strided_slice %6 {offsets = [1, 1], sizes = [64, 64], strides = [1, 1]} : vector<66x128xf32> to vector<64x64xf32>
    %c4 = arith.constant 4 : index
    %63 = memref.load %arg1[%c4] : memref<27xf32, #tpu.memory_space<smem>>
    %64 = vector.broadcast %63 : f32 to vector<64x64xf32>
    %65 = arith.mulf %64, %62 : vector<64x64xf32>
    %66 = arith.addf %53, %65 : vector<64x64xf32>
    %c13 = arith.constant 13 : index
    %67 = memref.load %arg1[%c13] : memref<27xf32, #tpu.memory_space<smem>>
    %68 = vector.broadcast %67 : f32 to vector<64x64xf32>
    %69 = arith.mulf %68, %62 : vector<64x64xf32>
    %70 = arith.addf %57, %69 : vector<64x64xf32>
    %c22 = arith.constant 22 : index
    %71 = memref.load %arg1[%c22] : memref<27xf32, #tpu.memory_space<smem>>
    %72 = vector.broadcast %71 : f32 to vector<64x64xf32>
    %73 = arith.mulf %72, %62 : vector<64x64xf32>
    %74 = arith.addf %61, %73 : vector<64x64xf32>
    %75 = vector.extract_strided_slice %6 {offsets = [1, 2], sizes = [64, 64], strides = [1, 1]} : vector<66x128xf32> to vector<64x64xf32>
    %c5 = arith.constant 5 : index
    %76 = memref.load %arg1[%c5] : memref<27xf32, #tpu.memory_space<smem>>
    %77 = vector.broadcast %76 : f32 to vector<64x64xf32>
    %78 = arith.mulf %77, %75 : vector<64x64xf32>
    %79 = arith.addf %66, %78 : vector<64x64xf32>
    %c14 = arith.constant 14 : index
    %80 = memref.load %arg1[%c14] : memref<27xf32, #tpu.memory_space<smem>>
    %81 = vector.broadcast %80 : f32 to vector<64x64xf32>
    %82 = arith.mulf %81, %75 : vector<64x64xf32>
    %83 = arith.addf %70, %82 : vector<64x64xf32>
    %c23 = arith.constant 23 : index
    %84 = memref.load %arg1[%c23] : memref<27xf32, #tpu.memory_space<smem>>
    %85 = vector.broadcast %84 : f32 to vector<64x64xf32>
    %86 = arith.mulf %85, %75 : vector<64x64xf32>
    %87 = arith.addf %74, %86 : vector<64x64xf32>
    %88 = vector.extract_strided_slice %6 {offsets = [2, 0], sizes = [64, 64], strides = [1, 1]} : vector<66x128xf32> to vector<64x64xf32>
    %c6 = arith.constant 6 : index
    %89 = memref.load %arg1[%c6] : memref<27xf32, #tpu.memory_space<smem>>
    %90 = vector.broadcast %89 : f32 to vector<64x64xf32>
    %91 = arith.mulf %90, %88 : vector<64x64xf32>
    %92 = arith.addf %79, %91 : vector<64x64xf32>
    %c15 = arith.constant 15 : index
    %93 = memref.load %arg1[%c15] : memref<27xf32, #tpu.memory_space<smem>>
    %94 = vector.broadcast %93 : f32 to vector<64x64xf32>
    %95 = arith.mulf %94, %88 : vector<64x64xf32>
    %96 = arith.addf %83, %95 : vector<64x64xf32>
    %c24 = arith.constant 24 : index
    %97 = memref.load %arg1[%c24] : memref<27xf32, #tpu.memory_space<smem>>
    %98 = vector.broadcast %97 : f32 to vector<64x64xf32>
    %99 = arith.mulf %98, %88 : vector<64x64xf32>
    %100 = arith.addf %87, %99 : vector<64x64xf32>
    %101 = vector.extract_strided_slice %6 {offsets = [2, 1], sizes = [64, 64], strides = [1, 1]} : vector<66x128xf32> to vector<64x64xf32>
    %c7 = arith.constant 7 : index
    %102 = memref.load %arg1[%c7] : memref<27xf32, #tpu.memory_space<smem>>
    %103 = vector.broadcast %102 : f32 to vector<64x64xf32>
    %104 = arith.mulf %103, %101 : vector<64x64xf32>
    %105 = arith.addf %92, %104 : vector<64x64xf32>
    %c16 = arith.constant 16 : index
    %106 = memref.load %arg1[%c16] : memref<27xf32, #tpu.memory_space<smem>>
    %107 = vector.broadcast %106 : f32 to vector<64x64xf32>
    %108 = arith.mulf %107, %101 : vector<64x64xf32>
    %109 = arith.addf %96, %108 : vector<64x64xf32>
    %c25 = arith.constant 25 : index
    %110 = memref.load %arg1[%c25] : memref<27xf32, #tpu.memory_space<smem>>
    %111 = vector.broadcast %110 : f32 to vector<64x64xf32>
    %112 = arith.mulf %111, %101 : vector<64x64xf32>
    %113 = arith.addf %100, %112 : vector<64x64xf32>
    %114 = vector.extract_strided_slice %6 {offsets = [2, 2], sizes = [64, 64], strides = [1, 1]} : vector<66x128xf32> to vector<64x64xf32>
    %c8 = arith.constant 8 : index
    %115 = memref.load %arg1[%c8] : memref<27xf32, #tpu.memory_space<smem>>
    %116 = vector.broadcast %115 : f32 to vector<64x64xf32>
    %117 = arith.mulf %116, %114 : vector<64x64xf32>
    %118 = arith.addf %105, %117 : vector<64x64xf32>
    %c17 = arith.constant 17 : index
    %119 = memref.load %arg1[%c17] : memref<27xf32, #tpu.memory_space<smem>>
    %120 = vector.broadcast %119 : f32 to vector<64x64xf32>
    %121 = arith.mulf %120, %114 : vector<64x64xf32>
    %122 = arith.addf %109, %121 : vector<64x64xf32>
    %c26 = arith.constant 26 : index
    %123 = memref.load %arg1[%c26] : memref<27xf32, #tpu.memory_space<smem>>
    %124 = vector.broadcast %123 : f32 to vector<64x64xf32>
    %125 = arith.mulf %124, %114 : vector<64x64xf32>
    %126 = arith.addf %113, %125 : vector<64x64xf32>
    %c0_9 = arith.constant 0 : index
    %127 = memref.load %arg2[%c0_9] : memref<3xf32, #tpu.memory_space<smem>>
    %128 = vector.broadcast %127 : f32 to vector<64x64xf32>
    %129 = arith.addf %118, %128 : vector<64x64xf32>
    %130 = math.tanh %129 : vector<64x64xf32>
    %c0_10 = arith.constant 0 : index
    %c0_11 = arith.constant 0 : index
    %c0_12 = arith.constant 0 : index
    %c0_13 = arith.constant 0 : index
    %131 = vector.load %arg4[%c0_10, %c0_11, %c0_12, %c0_13] : memref<1x3x64x64xf32, #tpu.memory_space<vmem>>, vector<1x1x64x64xf32>
    %132 = vector.shape_cast %131 : vector<1x1x64x64xf32> to vector<64x64xf32>
    %133 = vector.shape_cast %130 : vector<64x64xf32> to vector<1x1x64x64xf32>
    tpu.vector_store %arg4[%c0_10, %c0_11, %c0_12, %c0_13], %133 {strides = array<i32>} : memref<1x3x64x64xf32, #tpu.memory_space<vmem>>, vector<1x1x64x64xf32>,
    %c1_14 = arith.constant 1 : index
    %134 = memref.load %arg2[%c1_14] : memref<3xf32, #tpu.memory_space<smem>>
    %135 = vector.broadcast %134 : f32 to vector<64x64xf32>
    %136 = arith.addf %122, %135 : vector<64x64xf32>
    %137 = math.tanh %136 : vector<64x64xf32>
    %c0_15 = arith.constant 0 : index
    %c1_16 = arith.constant 1 : index
    %c0_17 = arith.constant 0 : index
    %c0_18 = arith.constant 0 : index
    %138 = vector.load %arg4[%c0_15, %c1_16, %c0_17, %c0_18] : memref<1x3x64x64xf32, #tpu.memory_space<vmem>>, vector<1x1x64x64xf32>
    %139 = vector.shape_cast %138 : vector<1x1x64x64xf32> to vector<64x64xf32>
    %140 = vector.shape_cast %137 : vector<64x64xf32> to vector<1x1x64x64xf32>
    tpu.vector_store %arg4[%c0_15, %c1_16, %c0_17, %c0_18], %140 {strides = array<i32>} : memref<1x3x64x64xf32, #tpu.memory_space<vmem>>, vector<1x1x64x64xf32>,
    %c2_19 = arith.constant 2 : index
    %141 = memref.load %arg2[%c2_19] : memref<3xf32, #tpu.memory_space<smem>>
    %142 = vector.broadcast %141 : f32 to vector<64x64xf32>
    %143 = arith.addf %126, %142 : vector<64x64xf32>
    %144 = math.tanh %143 : vector<64x64xf32>
    %c0_20 = arith.constant 0 : index
    %c2_21 = arith.constant 2 : index
    %c0_22 = arith.constant 0 : index
    %c0_23 = arith.constant 0 : index
    %145 = vector.load %arg4[%c0_20, %c2_21, %c0_22, %c0_23] : memref<1x3x64x64xf32, #tpu.memory_space<vmem>>, vector<1x1x64x64xf32>
    %146 = vector.shape_cast %145 : vector<1x1x64x64xf32> to vector<64x64xf32>
    %147 = vector.shape_cast %144 : vector<64x64xf32> to vector<1x1x64x64xf32>
    tpu.vector_store %arg4[%c0_20, %c2_21, %c0_22, %c0_23], %147 {strides = array<i32>} : memref<1x3x64x64xf32, #tpu.memory_space<vmem>>, vector<1x1x64x64xf32>,
    return
  }
  func.func @transform_0(%arg0: i32, %arg1: memref<27xf32, #tpu.memory_space<smem>>, %arg2: memref<3xf32, #tpu.memory_space<smem>>) -> (i32, i32, i32, i32) {
    %c0_i32 = arith.constant 0 : i32
    %c0_i32_0 = arith.constant 0 : i32
    %c0_i32_1 = arith.constant 0 : i32
    %c0_i32_2 = arith.constant 0 : i32
    return %arg0, %c0_i32, %c0_i32_0, %c0_i32_1 : i32, i32, i32, i32
  }
  func.func @transform_1(%arg0: i32, %arg1: memref<27xf32, #tpu.memory_space<smem>>, %arg2: memref<3xf32, #tpu.memory_space<smem>>) -> (i32, i32, i32, i32) {
    %c0_i32 = arith.constant 0 : i32
    %c0_i32_0 = arith.constant 0 : i32
    %c0_i32_1 = arith.constant 0 : i32
    %c0_i32_2 = arith.constant 0 : i32
    return %arg0, %c0_i32, %c0_i32_0, %c0_i32_1 : i32, i32, i32, i32
  }
}

</mosaic_0001>

<llo_original>
// kernel: tpu_custom_call.1
$region0: #{tpu_custom_call.1}
  #allocation0 [shape = 'u32[]', space=smem, size = 0x4, offset = 0x4, fixed_abs, tag = 'smem constant byte address 0x4 - core index']
  #allocation1 [shape = 'u32[72,128]{1,0:T(1,128)}', space=vmem, size = 0x9000, scoped, tag = 'internal scratch']
  #allocation2 [shape = 's32[1]{0}', space=sflag, size = 0x4, scoped, tag = 'scoped memory for tpu_custom_call.1']
  #allocation3 [shape = 'u8[512]{0}', space=smem, size = 0x200, scoped, tag = 'prefetched SMEM operand 0']
  #allocation4 [shape = 'u8[512]{0}', space=smem, size = 0x200, scoped, tag = 'prefetched SMEM operand 1']
  %s0 = inlined_call_operand.hbm [shape: f32[27], index: 0, kind: input, shape index: {}]
  %s1 = inlined_call_operand.hbm [shape: f32[3], index: 1, kind: input, shape index: {}]
  %s2 = inlined_call_operand.hbm [shape: f32[1,1,64,64], index: 2, kind: input, shape index: {}]
  %s3 = inlined_call_operand.hbm [shape: f32[1,3,64,64], index: 3, kind: output, shape index: {}]
  %s4 = sld [smem:[#allocation0]]
  $region18: #{tpu_custom_call.1} parent=0
    _
  %s6 = ssub.s32 1, %s4
  %s7 = scalar_select 0, %s6, %s4
  %s9 = sshll.u32 %s0, 4
  %s10 = int_to_ptr.hbm [resolvable:$true] %s9
  %12 = dma.hbm_to_smem %s10, 16, [#allocation3], [#allocation2]
  %s14 = sshll.u32 %s1, 4
  %s15 = int_to_ptr.hbm [resolvable:$true] %s14
  %17 = dma.hbm_to_smem %s15, 16, [#allocation4], [#allocation2]
  %19 = dma.done [#allocation2], 32
  %20 = sfence
  $region1: #{tpu_custom_call.1} parent=0
    #allocation5 [shape = 'u8[32768]{0}', space=vmem, size = 0x8000, scoped, tag = 'input window, operand 2, single buffered']
    #allocation6 [shape = 's32[1]{0}', space=sflag, size = 0x4, scoped, tag = 'scoped memory for tpu_custom_call.1']
    #allocation7 [shape = 's32[1]{0}', space=sflag, size = 0x4, scoped, tag = 'scoped memory for tpu_custom_call.1']
    #allocation8 [shape = 'u8[98304]{0}', space=vmem, size = 0x18000, scoped, tag = 'output window, operand 0, single buffered']
    %21 = vsyncpa [#allocation6], 0
    %22 = vsyncpa [#allocation7], 0
    // Predicated region
    $region2: #{tpu_custom_call.1} parent=1 // pred_check
      _
    $region3: #{tpu_custom_call.1} parent=1 // pred_check_branch
      %24 = sbr.rel (0) target = $region5
    $region4: #{tpu_custom_call.1} parent=1 // pred_region
      %26 = vsyncadd [#allocation6], 0
      %s27 = sshll.u32 %s2, 4
      %s28 = int_to_ptr.hbm [resolvable:$true] %s27
      %s29 = sshll.u32 [#allocation5], 4
      %s30 = int_to_ptr.vmem [resolvable:$true] %s29
      %35 = dma.hbm_to_vmem [thread:$0]  %s28, 1024, %s30, [#allocation6], 128, 128, 8
    $region5: #{tpu_custom_call.1} parent=1 // pred_fallthru
      _
    // Predicated region
    $region6: #{tpu_custom_call.1} parent=1 // pred_check
      _
    $region7: #{tpu_custom_call.1} parent=1 // pred_check_branch
      %37 = sbr.rel (0) target = $region9
    $region8: #{tpu_custom_call.1} parent=1 // pred_region
      %39 = dma.done [#allocation6], 1024
    $region9: #{tpu_custom_call.1} parent=1 // pred_fallthru
      _
    %v40 = vld [vmem:[#allocation5] sm:$0xff]
    %v41 = vld [vmem:[#allocation5 + $0x8] sm:$0xff]
    %v42 = vld [vmem:[#allocation5 + $0x10] sm:$0xff]
    %v43 = vld [vmem:[#allocation5 + $0x18] sm:$0xff]
    %v44 = vld [vmem:[#allocation5 + $0x20] sm:$0xff]
    %v45 = vld [vmem:[#allocation5 + $0x28] sm:$0xff]
    %v46 = vld [vmem:[#allocation5 + $0x30] sm:$0xff]
    %v47 = vld [vmem:[#allocation5 + $0x38] sm:$0xff]
    %56 = vrot.lane.b32.xlu0 %v40, 1
    %v57 = vpop.permute.xlu0 %56
    %58 = vrot.lane.b32.xlu0 %v41, 1
    %v59 = vpop.permute.xlu0 %58
    %60 = vrot.lane.b32.xlu0 %v42, 1
    %v61 = vpop.permute.xlu0 %60
    %62 = vrot.lane.b32.xlu0 %v43, 1
    %v63 = vpop.permute.xlu0 %62
    %64 = vrot.lane.b32.xlu0 %v44, 1
    %v65 = vpop.permute.xlu0 %64
    %66 = vrot.lane.b32.xlu0 %v45, 1
    %v67 = vpop.permute.xlu0 %66
    %68 = vrot.lane.b32.xlu0 %v46, 1
    %v69 = vpop.permute.xlu0 %68
    %70 = vrot.lane.b32.xlu0 %v47, 1
    %v71 = vpop.permute.xlu0 %70
    %vm80 = vcmask 7168
    %v81 = vsel %vm80, 0.0, %v57
    %v82 = vsel %vm80, 0.0, %v59
    %v83 = vsel %vm80, 0.0, %v61
    %v84 = vsel %vm80, 0.0, %v63
    %v85 = vsel %vm80, 0.0, %v65
    %v86 = vsel %vm80, 0.0, %v67
    %v87 = vsel %vm80, 0.0, %v69
    %v88 = vsel %vm80, 0.0, %v71
    %vm89 = vcmask 531456
    %v90 = vsel %vm89, %v81, 0.0
    %v91 = vsel %vm89, %v82, 0.0
    %v92 = vsel %vm89, %v83, 0.0
    %v93 = vsel %vm89, %v84, 0.0
    %v94 = vsel %vm89, %v85, 0.0
    %v95 = vsel %vm89, %v86, 0.0
    %v96 = vsel %vm89, %v87, 0.0
    %v97 = vsel %vm89, %v88, 0.0
    %vm106 = vcmask 1040384
    %v107 = vrot.slane %v90, 7
    %v108 = vrot.slane %v91, 7
    %v109 = vsel %vm106, %v107, %v108
    %v110 = vrot.slane %v92, 7
    %v111 = vsel %vm106, %v108, %v110
    %v112 = vrot.slane %v93, 7
    %v113 = vsel %vm106, %v110, %v112
    %v114 = vrot.slane %v94, 7
    %v115 = vsel %vm106, %v112, %v114
    %v116 = vrot.slane %v95, 7
    %v117 = vsel %vm106, %v114, %v116
    %v118 = vrot.slane %v96, 7
    %v119 = vsel %vm106, %v116, %v118
    %v120 = vrot.slane %v97, 7
    %v121 = vsel %vm106, %v118, %v120
    %v131 = vsel %vm106, 0.0, %v107
    %v132 = vsel %vm106, %v120, 0.0
    %s133 = sld [smem:[#allocation3]]
    %v134 = vstv %s133
    %v135 = vmul.f32 %v134, %v131
    %v136 = vmul.f32 %v134, %v109
    %v137 = vmul.f32 %v134, %v111
    %v138 = vmul.f32 %v134, %v113
    %v139 = vmul.f32 %v134, %v115
    %v140 = vmul.f32 %v134, %v117
    %v141 = vmul.f32 %v134, %v119
    %v142 = vmul.f32 %v134, %v121
    %v143 = vadd.f32 %v135, 0.0
    %v144 = vadd.f32 %v136, 0.0
    %v145 = vadd.f32 %v137, 0.0
    %v146 = vadd.f32 %v138, 0.0
    %v147 = vadd.f32 %v139, 0.0
    %v148 = vadd.f32 %v140, 0.0
    %v149 = vadd.f32 %v141, 0.0
    %v150 = vadd.f32 %v142, 0.0
    %s151 = sld [smem:[#allocation3 + $0x9]]
    %v152 = vstv %s151
    %v153 = vmul.f32 %v152, %v131
    %v154 = vmul.f32 %v152, %v109
    %v155 = vmul.f32 %v152, %v111
    %v156 = vmul.f32 %v152, %v113
    %v157 = vmul.f32 %v152, %v115
    %v158 = vmul.f32 %v152, %v117
    %v159 = vmul.f32 %v152, %v119
    %v160 = vmul.f32 %v152, %v121
    %v161 = vadd.f32 %v153, 0.0
    %v162 = vadd.f32 %v154, 0.0
    %v163 = vadd.f32 %v155, 0.0
    %v164 = vadd.f32 %v156, 0.0
    %v165 = vadd.f32 %v157, 0.0
    %v166 = vadd.f32 %v158, 0.0
    %v167 = vadd.f32 %v159, 0.0
    %v168 = vadd.f32 %v160, 0.0
    %s169 = sld [smem:[#allocation3 + $0x12]]
    %v170 = vstv %s169
    %v171 = vmul.f32 %v170, %v131
    %v172 = vmul.f32 %v170, %v109
    %v173 = vmul.f32 %v170, %v111
    %v174 = vmul.f32 %v170, %v113
    %v175 = vmul.f32 %v170, %v115
    %v176 = vmul.f32 %v170, %v117
    %v177 = vmul.f32 %v170, %v119
    %v178 = vmul.f32 %v170, %v121
    %v179 = vadd.f32 %v171, 0.0
    %v180 = vadd.f32 %v172, 0.0
    %v181 = vadd.f32 %v173, 0.0
    %v182 = vadd.f32 %v174, 0.0
    %v183 = vadd.f32 %v175, 0.0
    %v184 = vadd.f32 %v176, 0.0
    %v185 = vadd.f32 %v177, 0.0
    %v186 = vadd.f32 %v178, 0.0
    %s187 = sld [smem:[#allocation3 + $0x1]]
    %v188 = vstv %s187
    %v189 = vmul.f32 %v188, %v131
    %v190 = vmul.f32 %v188, %v109
    %v191 = vmul.f32 %v188, %v111
    %v192 = vmul.f32 %v188, %v113
    %v193 = vmul.f32 %v188, %v115
    %v194 = vmul.f32 %v188, %v117
    %v195 = vmul.f32 %v188, %v119
    %v196 = vmul.f32 %v188, %v121
    %205 = vrot.lane.b32.xlu0 %v189, 127
    %v206 = vpop.permute.xlu0 %205
    %207 = vrot.lane.b32.xlu0 %v190, 127
    %v208 = vpop.permute.xlu0 %207
    %209 = vrot.lane.b32.xlu0 %v191, 127
    %v210 = vpop.permute.xlu0 %209
    %211 = vrot.lane.b32.xlu0 %v192, 127
    %v212 = vpop.permute.xlu0 %211
    %213 = vrot.lane.b32.xlu0 %v193, 127
    %v214 = vpop.permute.xlu0 %213
    %215 = vrot.lane.b32.xlu0 %v194, 127
    %v216 = vpop.permute.xlu0 %215
    %217 = vrot.lane.b32.xlu0 %v195, 127
    %v218 = vpop.permute.xlu0 %217
    %219 = vrot.lane.b32.xlu0 %v196, 127
    %v220 = vpop.permute.xlu0 %219
    %v229 = vadd.f32 %v143, %v206
    %v230 = vadd.f32 %v144, %v208
    %v231 = vadd.f32 %v145, %v210
    %v232 = vadd.f32 %v146, %v212
    %v233 = vadd.f32 %v147, %v214
    %v234 = vadd.f32 %v148, %v216
    %v235 = vadd.f32 %v149, %v218
    %v236 = vadd.f32 %v150, %v220
    %s237 = sld [smem:[#allocation3 + $0xa]]
    %v238 = vstv %s237
    %v239 = vmul.f32 %v238, %v131
    %v240 = vmul.f32 %v238, %v109
    %v241 = vmul.f32 %v238, %v111
    %v242 = vmul.f32 %v238, %v113
    %v243 = vmul.f32 %v238, %v115
    %v244 = vmul.f32 %v238, %v117
    %v245 = vmul.f32 %v238, %v119
    %v246 = vmul.f32 %v238, %v121
    %255 = vrot.lane.b32.xlu0 %v239, 127
    %v256 = vpop.permute.xlu0 %255
    %257 = vrot.lane.b32.xlu0 %v240, 127
    %v258 = vpop.permute.xlu0 %257
    %259 = vrot.lane.b32.xlu0 %v241, 127
    %v260 = vpop.permute.xlu0 %259
    %261 = vrot.lane.b32.xlu0 %v242, 127
    %v262 = vpop.permute.xlu0 %261
    %263 = vrot.lane.b32.xlu0 %v243, 127
    %v264 = vpop.permute.xlu0 %263
    %265 = vrot.lane.b32.xlu0 %v244, 127
    %v266 = vpop.permute.xlu0 %265
    %267 = vrot.lane.b32.xlu0 %v245, 127
    %v268 = vpop.permute.xlu0 %267
    %269 = vrot.lane.b32.xlu0 %v246, 127
    %v270 = vpop.permute.xlu0 %269
    %v279 = vadd.f32 %v161, %v256
    %v280 = vadd.f32 %v162, %v258
    %v281 = vadd.f32 %v163, %v260
    %v282 = vadd.f32 %v164, %v262
    %v283 = vadd.f32 %v165, %v264
    %v284 = vadd.f32 %v166, %v266
    %v285 = vadd.f32 %v167, %v268
    %v286 = vadd.f32 %v168, %v270
    %s287 = sld [smem:[#allocation3 + $0x13]]
    %v288 = vstv %s287
    %v289 = vmul.f32 %v288, %v131
    %v290 = vmul.f32 %v288, %v109
    %v291 = vmul.f32 %v288, %v111
    %v292 = vmul.f32 %v288, %v113
    %v293 = vmul.f32 %v288, %v115
    %v294 = vmul.f32 %v288, %v117
    %v295 = vmul.f32 %v288, %v119
    %v296 = vmul.f32 %v288, %v121
    %305 = vrot.lane.b32.xlu0 %v289, 127
    %v306 = vpop.permute.xlu0 %305
    %307 = vrot.lane.b32.xlu0 %v290, 127
    %v308 = vpop.permute.xlu0 %307
    %309 = vrot.lane.b32.xlu0 %v291, 127
    %v310 = vpop.permute.xlu0 %309
    %311 = vrot.lane.b32.xlu0 %v292, 127
    %v312 = vpop.permute.xlu0 %311
    %313 = vrot.lane.b32.xlu0 %v293, 127
    %v314 = vpop.permute.xlu0 %313
    %315 = vrot.lane.b32.xlu0 %v294, 127
    %v316 = vpop.permute.xlu0 %315
    %317 = vrot.lane.b32.xlu0 %v295, 127
    %v318 = vpop.permute.xlu0 %317
    %319 = vrot.lane.b32.xlu0 %v296, 127
    %v320 = vpop.permute.xlu0 %319
    %v329 = vadd.f32 %v179, %v306
    %v330 = vadd.f32 %v180, %v308
    %v331 = vadd.f32 %v181, %v310
    %v332 = vadd.f32 %v182, %v312
    %v333 = vadd.f32 %v183, %v314
    %v334 = vadd.f32 %v184, %v316
    %v335 = vadd.f32 %v185, %v318
    %v336 = vadd.f32 %v186, %v320
    %s337 = sld [smem:[#allocation3 + $0x2]]
    %v338 = vstv %s337
    %v339 = vmul.f32 %v338, %v131
    %v340 = vmul.f32 %v338, %v109
    %v341 = vmul.f32 %v338, %v111
    %v342 = vmul.f32 %v338, %v113
    %v343 = vmul.f32 %v338, %v115
    %v344 = vmul.f32 %v338, %v117
    %v345 = vmul.f32 %v338, %v119
    %v346 = vmul.f32 %v338, %v121
    %355 = vrot.lane.b32.xlu0 %v339, 126
    %v356 = vpop.permute.xlu0 %355
    %357 = vrot.lane.b32.xlu0 %v340, 126
    %v358 = vpop.permute.xlu0 %357
    %359 = vrot.lane.b32.xlu0 %v341, 126
    %v360 = vpop.permute.xlu0 %359
    %361 = vrot.lane.b32.xlu0 %v342, 126
    %v362 = vpop.permute.xlu0 %361
    %363 = vrot.lane.b32.xlu0 %v343, 126
    %v364 = vpop.permute.xlu0 %363
    %365 = vrot.lane.b32.xlu0 %v344, 126
    %v366 = vpop.permute.xlu0 %365
    %367 = vrot.lane.b32.xlu0 %v345, 126
    %v368 = vpop.permute.xlu0 %367
    %369 = vrot.lane.b32.xlu0 %v346, 126
    %v370 = vpop.permute.xlu0 %369
    %v379 = vadd.f32 %v229, %v356
    %v380 = vadd.f32 %v230, %v358
    %v381 = vadd.f32 %v231, %v360
    %v382 = vadd.f32 %v232, %v362
    %v383 = vadd.f32 %v233, %v364
    %v384 = vadd.f32 %v234, %v366
    %v385 = vadd.f32 %v235, %v368
    %v386 = vadd.f32 %v236, %v370
    %s387 = sld [smem:[#allocation3 + $0xb]]
    %v388 = vstv %s387
    %v389 = vmul.f32 %v388, %v131
    %v390 = vmul.f32 %v388, %v109
    %v391 = vmul.f32 %v388, %v111
    %v392 = vmul.f32 %v388, %v113
    %v393 = vmul.f32 %v388, %v115
    %v394 = vmul.f32 %v388, %v117
    %v395 = vmul.f32 %v388, %v119
    %v396 = vmul.f32 %v388, %v121
    %405 = vrot.lane.b32.xlu0 %v389, 126
    %v406 = vpop.permute.xlu0 %405
    %407 = vrot.lane.b32.xlu0 %v390, 126
    %v408 = vpop.permute.xlu0 %407
    %409 = vrot.lane.b32.xlu0 %v391, 126
    %v410 = vpop.permute.xlu0 %409
    %411 = vrot.lane.b32.xlu0 %v392, 126
    %v412 = vpop.permute.xlu0 %411
    %413 = vrot.lane.b32.xlu0 %v393, 126
    %v414 = vpop.permute.xlu0 %413
    %415 = vrot.lane.b32.xlu0 %v394, 126
    %v416 = vpop.permute.xlu0 %415
    %417 = vrot.lane.b32.xlu0 %v395, 126
    %v418 = vpop.permute.xlu0 %417
    %419 = vrot.lane.b32.xlu0 %v396, 126
    %v420 = vpop.permute.xlu0 %419
    %v429 = vadd.f32 %v279, %v406
    %v430 = vadd.f32 %v280, %v408
    %v431 = vadd.f32 %v281, %v410
    %v432 = vadd.f32 %v282, %v412
    %v433 = vadd.f32 %v283, %v414
    %v434 = vadd.f32 %v284, %v416
    %v435 = vadd.f32 %v285, %v418
    %v436 = vadd.f32 %v286, %v420
    %s437 = sld [smem:[#allocation3 + $0x14]]
    %v438 = vstv %s437
    %v439 = vmul.f32 %v438, %v131
    %v440 = vmul.f32 %v438, %v109
    %v441 = vmul.f32 %v438, %v111
    %v442 = vmul.f32 %v438, %v113
    %v443 = vmul.f32 %v438, %v115
    %v444 = vmul.f32 %v438, %v117
    %v445 = vmul.f32 %v438, %v119
    %v446 = vmul.f32 %v438, %v121
    %455 = vrot.lane.b32.xlu0 %v439, 126
    %v456 = vpop.permute.xlu0 %455
    %457 = vrot.lane.b32.xlu0 %v440, 126
    %v458 = vpop.permute.xlu0 %457
    %459 = vrot.lane.b32.xlu0 %v441, 126
    %v460 = vpop.permute.xlu0 %459
    %461 = vrot.lane.b32.xlu0 %v442, 126
    %v462 = vpop.permute.xlu0 %461
    %463 = vrot.lane.b32.xlu0 %v443, 126
    %v464 = vpop.permute.xlu0 %463
    %465 = vrot.lane.b32.xlu0 %v444, 126
    %v466 = vpop.permute.xlu0 %465
    %467 = vrot.lane.b32.xlu0 %v445, 126
    %v468 = vpop.permute.xlu0 %467
    %469 = vrot.lane.b32.xlu0 %v446, 126
    %v470 = vpop.permute.xlu0 %469
    %v479 = vadd.f32 %v329, %v456
    %v480 = vadd.f32 %v330, %v458
    %v481 = vadd.f32 %v331, %v460
    %v482 = vadd.f32 %v332, %v462
    %v483 = vadd.f32 %v333, %v464
    %v484 = vadd.f32 %v334, %v466
    %v485 = vadd.f32 %v335, %v468
    %v486 = vadd.f32 %v336, %v470
    %s487 = sld [smem:[#allocation3 + $0x3]]
    %v488 = vstv %s487
    %v489 = vmul.f32 %v488, %v131
    %v490 = vmul.f32 %v488, %v109
    %v491 = vmul.f32 %v488, %v111
    %v492 = vmul.f32 %v488, %v113
    %v493 = vmul.f32 %v488, %v115
    %v494 = vmul.f32 %v488, %v117
    %v495 = vmul.f32 %v488, %v119
    %v496 = vmul.f32 %v488, %v121
    %v497 = vmul.f32 %v488, %v132
    %vm507 = vcmask 1046528
    %v508 = vrot.slane %v489, 1
    %v509 = vrot.slane %v490, 1
    %v510 = vsel %vm507, %v508, %v509
    %v511 = vrot.slane %v491, 1
    %v512 = vsel %vm507, %v509, %v511
    %v513 = vrot.slane %v492, 1
    %v514 = vsel %vm507, %v511, %v513
    %v515 = vrot.slane %v493, 1
    %v516 = vsel %vm507, %v513, %v515
    %v517 = vrot.slane %v494, 1
    %v518 = vsel %vm507, %v515, %v517
    %v519 = vrot.slane %v495, 1
    %v520 = vsel %vm507, %v517, %v519
    %v521 = vrot.slane %v496, 1
    %v522 = vsel %vm507, %v519, %v521
    %v523 = vrot.slane %v497, 1
    %v524 = vsel %vm507, %v521, %v523
    %v533 = vadd.f32 %v379, %v510
    %v534 = vadd.f32 %v380, %v512
    %v535 = vadd.f32 %v381, %v514
    %v536 = vadd.f32 %v382, %v516
    %v537 = vadd.f32 %v383, %v518
    %v538 = vadd.f32 %v384, %v520
    %v539 = vadd.f32 %v385, %v522
    %v540 = vadd.f32 %v386, %v524
    %s541 = sld [smem:[#allocation3 + $0xc]]
    %v542 = vstv %s541
    %v543 = vmul.f32 %v542, %v131
    %v544 = vmul.f32 %v542, %v109
    %v545 = vmul.f32 %v542, %v111
    %v546 = vmul.f32 %v542, %v113
    %v547 = vmul.f32 %v542, %v115
    %v548 = vmul.f32 %v542, %v117
    %v549 = vmul.f32 %v542, %v119
    %v550 = vmul.f32 %v542, %v121
    %v551 = vmul.f32 %v542, %v132
    %v561 = vrot.slane %v543, 1
    %v562 = vrot.slane %v544, 1
    %v563 = vsel %vm507, %v561, %v562
    %v564 = vrot.slane %v545, 1
    %v565 = vsel %vm507, %v562, %v564
    %v566 = vrot.slane %v546, 1
    %v567 = vsel %vm507, %v564, %v566
    %v568 = vrot.slane %v547, 1
    %v569 = vsel %vm507, %v566, %v568
    %v570 = vrot.slane %v548, 1
    %v571 = vsel %vm507, %v568, %v570
    %v572 = vrot.slane %v549, 1
    %v573 = vsel %vm507, %v570, %v572
    %v574 = vrot.slane %v550, 1
    %v575 = vsel %vm507, %v572, %v574
    %v576 = vrot.slane %v551, 1
    %v577 = vsel %vm507, %v574, %v576
    %v586 = vadd.f32 %v429, %v563
    %v587 = vadd.f32 %v430, %v565
    %v588 = vadd.f32 %v431, %v567
    %v589 = vadd.f32 %v432, %v569
    %v590 = vadd.f32 %v433, %v571
    %v591 = vadd.f32 %v434, %v573
    %v592 = vadd.f32 %v435, %v575
    %v593 = vadd.f32 %v436, %v577
    %s594 = sld [smem:[#allocation3 + $0x15]]
    %v595 = vstv %s594
    %v596 = vmul.f32 %v595, %v131
    %v597 = vmul.f32 %v595, %v109
    %v598 = vmul.f32 %v595, %v111
    %v599 = vmul.f32 %v595, %v113
    %v600 = vmul.f32 %v595, %v115
    %v601 = vmul.f32 %v595, %v117
    %v602 = vmul.f32 %v595, %v119
    %v603 = vmul.f32 %v595, %v121
    %v604 = vmul.f32 %v595, %v132
    %v614 = vrot.slane %v596, 1
    %v615 = vrot.slane %v597, 1
    %v616 = vsel %vm507, %v614, %v615
    %v617 = vrot.slane %v598, 1
    %v618 = vsel %vm507, %v615, %v617
    %v619 = vrot.slane %v599, 1
    %v620 = vsel %vm507, %v617, %v619
    %v621 = vrot.slane %v600, 1
    %v622 = vsel %vm507, %v619, %v621
    %v623 = vrot.slane %v601, 1
    %v624 = vsel %vm507, %v621, %v623
    %v625 = vrot.slane %v602, 1
    %v626 = vsel %vm507, %v623, %v625
    %v627 = vrot.slane %v603, 1
    %v628 = vsel %vm507, %v625, %v627
    %v629 = vrot.slane %v604, 1
    %v630 = vsel %vm507, %v627, %v629
    %v639 = vadd.f32 %v479, %v616
    %v640 = vadd.f32 %v480, %v618
    %v641 = vadd.f32 %v481, %v620
    %v642 = vadd.f32 %v482, %v622
    %v643 = vadd.f32 %v483, %v624
    %v644 = vadd.f32 %v484, %v626
    %v645 = vadd.f32 %v485, %v628
    %v646 = vadd.f32 %v486, %v630
    %s647 = sld [smem:[#allocation3 + $0x4]]
    %v648 = vstv %s647
    %v649 = vmul.f32 %v648, %v131
    %v650 = vmul.f32 %v648, %v109
    %v651 = vmul.f32 %v648, %v111
    %v652 = vmul.f32 %v648, %v113
    %v653 = vmul.f32 %v648, %v115
    %v654 = vmul.f32 %v648, %v117
    %v655 = vmul.f32 %v648, %v119
    %v656 = vmul.f32 %v648, %v121
    %v657 = vmul.f32 %v648, %v132
    %v667 = vrot.slane %v649, 1
    %v668 = vrot.slane %v650, 1
    %v669 = vsel %vm507, %v667, %v668
    %v670 = vrot.slane %v651, 1
    %v671 = vsel %vm507, %v668, %v670
    %v672 = vrot.slane %v652, 1
    %v673 = vsel %vm507, %v670, %v672
    %v674 = vrot.slane %v653, 1
    %v675 = vsel %vm507, %v672, %v674
    %v676 = vrot.slane %v654, 1
    %v677 = vsel %vm507, %v674, %v676
    %v678 = vrot.slane %v655, 1
    %v679 = vsel %vm507, %v676, %v678
    %v680 = vrot.slane %v656, 1
    %v681 = vsel %vm507, %v678, %v680
    %v682 = vrot.slane %v657, 1
    %v683 = vsel %vm507, %v680, %v682
    %684 = vrot.lane.b32.xlu0 %v669, 127
    %v685 = vpop.permute.xlu0 %684
    %686 = vrot.lane.b32.xlu0 %v671, 127
    %v687 = vpop.permute.xlu0 %686
    %688 = vrot.lane.b32.xlu0 %v673, 127
    %v689 = vpop.permute.xlu0 %688
    %690 = vrot.lane.b32.xlu0 %v675, 127
    %v691 = vpop.permute.xlu0 %690
    %692 = vrot.lane.b32.xlu0 %v677, 127
    %v693 = vpop.permute.xlu0 %692
    %694 = vrot.lane.b32.xlu0 %v679, 127
    %v695 = vpop.permute.xlu0 %694
    %696 = vrot.lane.b32.xlu0 %v681, 127
    %v697 = vpop.permute.xlu0 %696
    %698 = vrot.lane.b32.xlu0 %v683, 127
    %v699 = vpop.permute.xlu0 %698
    %v708 = vadd.f32 %v533, %v685
    %v709 = vadd.f32 %v534, %v687
    %v710 = vadd.f32 %v535, %v689
    %v711 = vadd.f32 %v536, %v691
    %v712 = vadd.f32 %v537, %v693
    %v713 = vadd.f32 %v538, %v695
    %v714 = vadd.f32 %v539, %v697
    %v715 = vadd.f32 %v540, %v699
    %s716 = sld [smem:[#allocation3 + $0xd]]
    %v717 = vstv %s716
    %v718 = vmul.f32 %v717, %v131
    %v719 = vmul.f32 %v717, %v109
    %v720 = vmul.f32 %v717, %v111
    %v721 = vmul.f32 %v717, %v113
    %v722 = vmul.f32 %v717, %v115
    %v723 = vmul.f32 %v717, %v117
    %v724 = vmul.f32 %v717, %v119
    %v725 = vmul.f32 %v717, %v121
    %v726 = vmul.f32 %v717, %v132
    %v736 = vrot.slane %v718, 1
    %v737 = vrot.slane %v719, 1
    %v738 = vsel %vm507, %v736, %v737
    %v739 = vrot.slane %v720, 1
    %v740 = vsel %vm507, %v737, %v739
    %v741 = vrot.slane %v721, 1
    %v742 = vsel %vm507, %v739, %v741
    %v743 = vrot.slane %v722, 1
    %v744 = vsel %vm507, %v741, %v743
    %v745 = vrot.slane %v723, 1
    %v746 = vsel %vm507, %v743, %v745
    %v747 = vrot.slane %v724, 1
    %v748 = vsel %vm507, %v745, %v747
    %v749 = vrot.slane %v725, 1
    %v750 = vsel %vm507, %v747, %v749
    %v751 = vrot.slane %v726, 1
    %v752 = vsel %vm507, %v749, %v751
    %753 = vrot.lane.b32.xlu0 %v738, 127
    %v754 = vpop.permute.xlu0 %753
    %755 = vrot.lane.b32.xlu0 %v740, 127
    %v756 = vpop.permute.xlu0 %755
    %757 = vrot.lane.b32.xlu0 %v742, 127
    %v758 = vpop.permute.xlu0 %757
    %759 = vrot.lane.b32.xlu0 %v744, 127
    %v760 = vpop.permute.xlu0 %759
    %761 = vrot.lane.b32.xlu0 %v746, 127
    %v762 = vpop.permute.xlu0 %761
    %763 = vrot.lane.b32.xlu0 %v748, 127
    %v764 = vpop.permute.xlu0 %763
    %765 = vrot.lane.b32.xlu0 %v750, 127
    %v766 = vpop.permute.xlu0 %765
    %767 = vrot.lane.b32.xlu0 %v752, 127
    %v768 = vpop.permute.xlu0 %767
    %v777 = vadd.f32 %v586, %v754
    %v778 = vadd.f32 %v587, %v756
    %v779 = vadd.f32 %v588, %v758
    %v780 = vadd.f32 %v589, %v760
    %v781 = vadd.f32 %v590, %v762
    %v782 = vadd.f32 %v591, %v764
    %v783 = vadd.f32 %v592, %v766
    %v784 = vadd.f32 %v593, %v768
    %s785 = sld [smem:[#allocation3 + $0x16]]
    %v786 = vstv %s785
    %v787 = vmul.f32 %v786, %v131
    %v788 = vmul.f32 %v786, %v109
    %v789 = vmul.f32 %v786, %v111
    %v790 = vmul.f32 %v786, %v113
    %v791 = vmul.f32 %v786, %v115
    %v792 = vmul.f32 %v786, %v117
    %v793 = vmul.f32 %v786, %v119
    %v794 = vmul.f32 %v786, %v121
    %v795 = vmul.f32 %v786, %v132
    %v805 = vrot.slane %v787, 1
    %v806 = vrot.slane %v788, 1
    %v807 = vsel %vm507, %v805, %v806
    %v808 = vrot.slane %v789, 1
    %v809 = vsel %vm507, %v806, %v808
    %v810 = vrot.slane %v790, 1
    %v811 = vsel %vm507, %v808, %v810
    %v812 = vrot.slane %v791, 1
    %v813 = vsel %vm507, %v810, %v812
    %v814 = vrot.slane %v792, 1
    %v815 = vsel %vm507, %v812, %v814
    %v816 = vrot.slane %v793, 1
    %v817 = vsel %vm507, %v814, %v816
    %v818 = vrot.slane %v794, 1
    %v819 = vsel %vm507, %v816, %v818
    %v820 = vrot.slane %v795, 1
    %v821 = vsel %vm507, %v818, %v820
    %822 = vrot.lane.b32.xlu0 %v807, 127
    %v823 = vpop.permute.xlu0 %822
    %824 = vrot.lane.b32.xlu0 %v809, 127
    %v825 = vpop.permute.xlu0 %824
    %826 = vrot.lane.b32.xlu0 %v811, 127
    %v827 = vpop.permute.xlu0 %826
    %828 = vrot.lane.b32.xlu0 %v813, 127
    %v829 = vpop.permute.xlu0 %828
    %830 = vrot.lane.b32.xlu0 %v815, 127
    %v831 = vpop.permute.xlu0 %830
    %832 = vrot.lane.b32.xlu0 %v817, 127
    %v833 = vpop.permute.xlu0 %832
    %834 = vrot.lane.b32.xlu0 %v819, 127
    %v835 = vpop.permute.xlu0 %834
    %836 = vrot.lane.b32.xlu0 %v821, 127
    %v837 = vpop.permute.xlu0 %836
    %v846 = vadd.f32 %v639, %v823
    %v847 = vadd.f32 %v640, %v825
    %v848 = vadd.f32 %v641, %v827
    %v849 = vadd.f32 %v642, %v829
    %v850 = vadd.f32 %v643, %v831
    %v851 = vadd.f32 %v644, %v833
    %v852 = vadd.f32 %v645, %v835
    %v853 = vadd.f32 %v646, %v837
    %s854 = sld [smem:[#allocation3 + $0x5]]
    %v855 = vstv %s854
    %v856 = vmul.f32 %v855, %v131
    %v857 = vmul.f32 %v855, %v109
    %v858 = vmul.f32 %v855, %v111
    %v859 = vmul.f32 %v855, %v113
    %v860 = vmul.f32 %v855, %v115
    %v861 = vmul.f32 %v855, %v117
    %v862 = vmul.f32 %v855, %v119
    %v863 = vmul.f32 %v855, %v121
    %v864 = vmul.f32 %v855, %v132
    %v874 = vrot.slane %v856, 1
    %v875 = vrot.slane %v857, 1
    %v876 = vsel %vm507, %v874, %v875
    %v877 = vrot.slane %v858, 1
    %v878 = vsel %vm507, %v875, %v877
    %v879 = vrot.slane %v859, 1
    %v880 = vsel %vm507, %v877, %v879
    %v881 = vrot.slane %v860, 1
    %v882 = vsel %vm507, %v879, %v881
    %v883 = vrot.slane %v861, 1
    %v884 = vsel %vm507, %v881, %v883
    %v885 = vrot.slane %v862, 1
    %v886 = vsel %vm507, %v883, %v885
    %v887 = vrot.slane %v863, 1
    %v888 = vsel %vm507, %v885, %v887
    %v889 = vrot.slane %v864, 1
    %v890 = vsel %vm507, %v887, %v889
    %891 = vrot.lane.b32.xlu0 %v876, 126
    %v892 = vpop.permute.xlu0 %891
    %893 = vrot.lane.b32.xlu0 %v878, 126
    %v894 = vpop.permute.xlu0 %893
    %895 = vrot.lane.b32.xlu0 %v880, 126
    %v896 = vpop.permute.xlu0 %895
    %897 = vrot.lane.b32.xlu0 %v882, 126
    %v898 = vpop.permute.xlu0 %897
    %899 = vrot.lane.b32.xlu0 %v884, 126
    %v900 = vpop.permute.xlu0 %899
    %901 = vrot.lane.b32.xlu0 %v886, 126
    %v902 = vpop.permute.xlu0 %901
    %903 = vrot.lane.b32.xlu0 %v888, 126
    %v904 = vpop.permute.xlu0 %903
    %905 = vrot.lane.b32.xlu0 %v890, 126
    %v906 = vpop.permute.xlu0 %905
    %v915 = vadd.f32 %v708, %v892
    %v916 = vadd.f32 %v709, %v894
    %v917 = vadd.f32 %v710, %v896
    %v918 = vadd.f32 %v711, %v898
    %v919 = vadd.f32 %v712, %v900
    %v920 = vadd.f32 %v713, %v902
    %v921 = vadd.f32 %v714, %v904
    %v922 = vadd.f32 %v715, %v906
    %s923 = sld [smem:[#allocation3 + $0xe]]
    %v924 = vstv %s923
    %v925 = vmul.f32 %v924, %v131
    %v926 = vmul.f32 %v924, %v109
    %v927 = vmul.f32 %v924, %v111
    %v928 = vmul.f32 %v924, %v113
    %v929 = vmul.f32 %v924, %v115
    %v930 = vmul.f32 %v924, %v117
    %v931 = vmul.f32 %v924, %v119
    %v932 = vmul.f32 %v924, %v121
    %v933 = vmul.f32 %v924, %v132
    %v943 = vrot.slane %v925, 1
    %v944 = vrot.slane %v926, 1
    %v945 = vsel %vm507, %v943, %v944
    %v946 = vrot.slane %v927, 1
    %v947 = vsel %vm507, %v944, %v946
    %v948 = vrot.slane %v928, 1
    %v949 = vsel %vm507, %v946, %v948
    %v950 = vrot.slane %v929, 1
    %v951 = vsel %vm507, %v948, %v950
    %v952 = vrot.slane %v930, 1
    %v953 = vsel %vm507, %v950, %v952
    %v954 = vrot.slane %v931, 1
    %v955 = vsel %vm507, %v952, %v954
    %v956 = vrot.slane %v932, 1
    %v957 = vsel %vm507, %v954, %v956
    %v958 = vrot.slane %v933, 1
    %v959 = vsel %vm507, %v956, %v958
    %960 = vrot.lane.b32.xlu0 %v945, 126
    %v961 = vpop.permute.xlu0 %960
    %962 = vrot.lane.b32.xlu0 %v947, 126
    %v963 = vpop.permute.xlu0 %962
    %964 = vrot.lane.b32.xlu0 %v949, 126
    %v965 = vpop.permute.xlu0 %964
    %966 = vrot.lane.b32.xlu0 %v951, 126
    %v967 = vpop.permute.xlu0 %966
    %968 = vrot.lane.b32.xlu0 %v953, 126
    %v969 = vpop.permute.xlu0 %968
    %970 = vrot.lane.b32.xlu0 %v955, 126
    %v971 = vpop.permute.xlu0 %970
    %972 = vrot.lane.b32.xlu0 %v957, 126
    %v973 = vpop.permute.xlu0 %972
    %974 = vrot.lane.b32.xlu0 %v959, 126
    %v975 = vpop.permute.xlu0 %974
    %v984 = vadd.f32 %v777, %v961
    %v985 = vadd.f32 %v778, %v963
    %v986 = vadd.f32 %v779, %v965
    %v987 = vadd.f32 %v780, %v967
    %v988 = vadd.f32 %v781, %v969
    %v989 = vadd.f32 %v782, %v971
    %v990 = vadd.f32 %v783, %v973
    %v991 = vadd.f32 %v784, %v975
    %s992 = sld [smem:[#allocation3 + $0x17]]
    %v993 = vstv %s992
    %v994 = vmul.f32 %v993, %v131
    %v995 = vmul.f32 %v993, %v109
    %v996 = vmul.f32 %v993, %v111
    %v997 = vmul.f32 %v993, %v113
    %v998 = vmul.f32 %v993, %v115
    %v999 = vmul.f32 %v993, %v117
    %v1000 = vmul.f32 %v993, %v119
    %v1001 = vmul.f32 %v993, %v121
    %v1002 = vmul.f32 %v993, %v132
    %v1012 = vrot.slane %v994, 1
    %v1013 = vrot.slane %v995, 1
    %v1014 = vsel %vm507, %v1012, %v1013
    %v1015 = vrot.slane %v996, 1
    %v1016 = vsel %vm507, %v1013, %v1015
    %v1017 = vrot.slane %v997, 1
    %v1018 = vsel %vm507, %v1015, %v1017
    %v1019 = vrot.slane %v998, 1
    %v1020 = vsel %vm507, %v1017, %v1019
    %v1021 = vrot.slane %v999, 1
    %v1022 = vsel %vm507, %v1019, %v1021
    %v1023 = vrot.slane %v1000, 1
    %v1024 = vsel %vm507, %v1021, %v1023
    %v1025 = vrot.slane %v1001, 1
    %v1026 = vsel %vm507, %v1023, %v1025
    %v1027 = vrot.slane %v1002, 1
    %v1028 = vsel %vm507, %v1025, %v1027
    %1029 = vrot.lane.b32.xlu0 %v1014, 126
    %v1030 = vpop.permute.xlu0 %1029
    %1031 = vrot.lane.b32.xlu0 %v1016, 126
    %v1032 = vpop.permute.xlu0 %1031
    %1033 = vrot.lane.b32.xlu0 %v1018, 126
    %v1034 = vpop.permute.xlu0 %1033
    %1035 = vrot.lane.b32.xlu0 %v1020, 126
    %v1036 = vpop.permute.xlu0 %1035
    %1037 = vrot.lane.b32.xlu0 %v1022, 126
    %v1038 = vpop.permute.xlu0 %1037
    %1039 = vrot.lane.b32.xlu0 %v1024, 126
    %v1040 = vpop.permute.xlu0 %1039
    %1041 = vrot.lane.b32.xlu0 %v1026, 126
    %v1042 = vpop.permute.xlu0 %1041
    %1043 = vrot.lane.b32.xlu0 %v1028, 126
    %v1044 = vpop.permute.xlu0 %1043
    %v1053 = vadd.f32 %v846, %v1030
    %v1054 = vadd.f32 %v847, %v1032
    %v1055 = vadd.f32 %v848, %v1034
    %v1056 = vadd.f32 %v849, %v1036
    %v1057 = vadd.f32 %v850, %v1038
    %v1058 = vadd.f32 %v851, %v1040
    %v1059 = vadd.f32 %v852, %v1042
    %v1060 = vadd.f32 %v853, %v1044
    %s1061 = sld [smem:[#allocation3 + $0x6]]
    %v1062 = vstv %s1061
    %v1063 = vmul.f32 %v1062, %v131
    %v1064 = vmul.f32 %v1062, %v109
    %v1065 = vmul.f32 %v1062, %v111
    %v1066 = vmul.f32 %v1062, %v113
    %v1067 = vmul.f32 %v1062, %v115
    %v1068 = vmul.f32 %v1062, %v117
    %v1069 = vmul.f32 %v1062, %v119
    %v1070 = vmul.f32 %v1062, %v121
    %v1071 = vmul.f32 %v1062, %v132
    %vm1081 = vcmask 1045504
    %v1082 = vrot.slane %v1063, 2
    %v1083 = vrot.slane %v1064, 2
    %v1084 = vsel %vm1081, %v1082, %v1083
    %v1085 = vrot.slane %v1065, 2
    %v1086 = vsel %vm1081, %v1083, %v1085
    %v1087 = vrot.slane %v1066, 2
    %v1088 = vsel %vm1081, %v1085, %v1087
    %v1089 = vrot.slane %v1067, 2
    %v1090 = vsel %vm1081, %v1087, %v1089
    %v1091 = vrot.slane %v1068, 2
    %v1092 = vsel %vm1081, %v1089, %v1091
    %v1093 = vrot.slane %v1069, 2
    %v1094 = vsel %vm1081, %v1091, %v1093
    %v1095 = vrot.slane %v1070, 2
    %v1096 = vsel %vm1081, %v1093, %v1095
    %v1097 = vrot.slane %v1071, 2
    %v1098 = vsel %vm1081, %v1095, %v1097
    %v1107 = vadd.f32 %v915, %v1084
    %v1108 = vadd.f32 %v916, %v1086
    %v1109 = vadd.f32 %v917, %v1088
    %v1110 = vadd.f32 %v918, %v1090
    %v1111 = vadd.f32 %v919, %v1092
    %v1112 = vadd.f32 %v920, %v1094
    %v1113 = vadd.f32 %v921, %v1096
    %v1114 = vadd.f32 %v922, %v1098
    %s1115 = sld [smem:[#allocation3 + $0xf]]
    %v1116 = vstv %s1115
    %v1117 = vmul.f32 %v1116, %v131
    %v1118 = vmul.f32 %v1116, %v109
    %v1119 = vmul.f32 %v1116, %v111
    %v1120 = vmul.f32 %v1116, %v113
    %v1121 = vmul.f32 %v1116, %v115
    %v1122 = vmul.f32 %v1116, %v117
    %v1123 = vmul.f32 %v1116, %v119
    %v1124 = vmul.f32 %v1116, %v121
    %v1125 = vmul.f32 %v1116, %v132
    %v1135 = vrot.slane %v1117, 2
    %v1136 = vrot.slane %v1118, 2
    %v1137 = vsel %vm1081, %v1135, %v1136
    %v1138 = vrot.slane %v1119, 2
    %v1139 = vsel %vm1081, %v1136, %v1138
    %v1140 = vrot.slane %v1120, 2
    %v1141 = vsel %vm1081, %v1138, %v1140
    %v1142 = vrot.slane %v1121, 2
    %v1143 = vsel %vm1081, %v1140, %v1142
    %v1144 = vrot.slane %v1122, 2
    %v1145 = vsel %vm1081, %v1142, %v1144
    %v1146 = vrot.slane %v1123, 2
    %v1147 = vsel %vm1081, %v1144, %v1146
    %v1148 = vrot.slane %v1124, 2
    %v1149 = vsel %vm1081, %v1146, %v1148
    %v1150 = vrot.slane %v1125, 2
    %v1151 = vsel %vm1081, %v1148, %v1150
    %v1160 = vadd.f32 %v984, %v1137
    %v1161 = vadd.f32 %v985, %v1139
    %v1162 = vadd.f32 %v986, %v1141
    %v1163 = vadd.f32 %v987, %v1143
    %v1164 = vadd.f32 %v988, %v1145
    %v1165 = vadd.f32 %v989, %v1147
    %v1166 = vadd.f32 %v990, %v1149
    %v1167 = vadd.f32 %v991, %v1151
    %s1168 = sld [smem:[#allocation3 + $0x18]]
    %v1169 = vstv %s1168
    %v1170 = vmul.f32 %v1169, %v131
    %v1171 = vmul.f32 %v1169, %v109
    %v1172 = vmul.f32 %v1169, %v111
    %v1173 = vmul.f32 %v1169, %v113
    %v1174 = vmul.f32 %v1169, %v115
    %v1175 = vmul.f32 %v1169, %v117
    %v1176 = vmul.f32 %v1169, %v119
    %v1177 = vmul.f32 %v1169, %v121
    %v1178 = vmul.f32 %v1169, %v132
    %v1188 = vrot.slane %v1170, 2
    %v1189 = vrot.slane %v1171, 2
    %v1190 = vsel %vm1081, %v1188, %v1189
    %v1191 = vrot.slane %v1172, 2
    %v1192 = vsel %vm1081, %v1189, %v1191
    %v1193 = vrot.slane %v1173, 2
    %v1194 = vsel %vm1081, %v1191, %v1193
    %v1195 = vrot.slane %v1174, 2
    %v1196 = vsel %vm1081, %v1193, %v1195
    %v1197 = vrot.slane %v1175, 2
    %v1198 = vsel %vm1081, %v1195, %v1197
    %v1199 = vrot.slane %v1176, 2
    %v1200 = vsel %vm1081, %v1197, %v1199
    %v1201 = vrot.slane %v1177, 2
    %v1202 = vsel %vm1081, %v1199, %v1201
    %v1203 = vrot.slane %v1178, 2
    %v1204 = vsel %vm1081, %v1201, %v1203
    %v1213 = vadd.f32 %v1053, %v1190
    %v1214 = vadd.f32 %v1054, %v1192
    %v1215 = vadd.f32 %v1055, %v1194
    %v1216 = vadd.f32 %v1056, %v1196
    %v1217 = vadd.f32 %v1057, %v1198
    %v1218 = vadd.f32 %v1058, %v1200
    %v1219 = vadd.f32 %v1059, %v1202
    %v1220 = vadd.f32 %v1060, %v1204
    %s1221 = sld [smem:[#allocation3 + $0x7]]
    %v1222 = vstv %s1221
    %v1223 = vmul.f32 %v1222, %v131
    %v1224 = vmul.f32 %v1222, %v109
    %v1225 = vmul.f32 %v1222, %v111
    %v1226 = vmul.f32 %v1222, %v113
    %v1227 = vmul.f32 %v1222, %v115
    %v1228 = vmul.f32 %v1222, %v117
    %v1229 = vmul.f32 %v1222, %v119
    %v1230 = vmul.f32 %v1222, %v121
    %v1231 = vmul.f32 %v1222, %v132
    %v1241 = vrot.slane %v1223, 2
    %v1242 = vrot.slane %v1224, 2
    %v1243 = vsel %vm1081, %v1241, %v1242
    %v1244 = vrot.slane %v1225, 2
    %v1245 = vsel %vm1081, %v1242, %v1244
    %v1246 = vrot.slane %v1226, 2
    %v1247 = vsel %vm1081, %v1244, %v1246
    %v1248 = vrot.slane %v1227, 2
    %v1249 = vsel %vm1081, %v1246, %v1248
    %v1250 = vrot.slane %v1228, 2
    %v1251 = vsel %vm1081, %v1248, %v1250
    %v1252 = vrot.slane %v1229, 2
    %v1253 = vsel %vm1081, %v1250, %v1252
    %v1254 = vrot.slane %v1230, 2
    %v1255 = vsel %vm1081, %v1252, %v1254
    %v1256 = vrot.slane %v1231, 2
    %v1257 = vsel %vm1081, %v1254, %v1256
    %1258 = vrot.lane.b32.xlu0 %v1243, 127
    %v1259 = vpop.permute.xlu0 %1258
    %1260 = vrot.lane.b32.xlu0 %v1245, 127
    %v1261 = vpop.permute.xlu0 %1260
    %1262 = vrot.lane.b32.xlu0 %v1247, 127
    %v1263 = vpop.permute.xlu0 %1262
    %1264 = vrot.lane.b32.xlu0 %v1249, 127
    %v1265 = vpop.permute.xlu0 %1264
    %1266 = vrot.lane.b32.xlu0 %v1251, 127
    %v1267 = vpop.permute.xlu0 %1266
    %1268 = vrot.lane.b32.xlu0 %v1253, 127
    %v1269 = vpop.permute.xlu0 %1268
    %1270 = vrot.lane.b32.xlu0 %v1255, 127
    %v1271 = vpop.permute.xlu0 %1270
    %1272 = vrot.lane.b32.xlu0 %v1257, 127
    %v1273 = vpop.permute.xlu0 %1272
    %v1282 = vadd.f32 %v1107, %v1259
    %v1283 = vadd.f32 %v1108, %v1261
    %v1284 = vadd.f32 %v1109, %v1263
    %v1285 = vadd.f32 %v1110, %v1265
    %v1286 = vadd.f32 %v1111, %v1267
    %v1287 = vadd.f32 %v1112, %v1269
    %v1288 = vadd.f32 %v1113, %v1271
    %v1289 = vadd.f32 %v1114, %v1273
    %s1290 = sld [smem:[#allocation3 + $0x10]]
    %v1291 = vstv %s1290
    %v1292 = vmul.f32 %v1291, %v131
    %v1293 = vmul.f32 %v1291, %v109
    %v1294 = vmul.f32 %v1291, %v111
    %v1295 = vmul.f32 %v1291, %v113
    %v1296 = vmul.f32 %v1291, %v115
    %v1297 = vmul.f32 %v1291, %v117
    %v1298 = vmul.f32 %v1291, %v119
    %v1299 = vmul.f32 %v1291, %v121
    %v1300 = vmul.f32 %v1291, %v132
    %v1310 = vrot.slane %v1292, 2
    %v1311 = vrot.slane %v1293, 2
    %v1312 = vsel %vm1081, %v1310, %v1311
    %v1313 = vrot.slane %v1294, 2
    %v1314 = vsel %vm1081, %v1311, %v1313
    %v1315 = vrot.slane %v1295, 2
    %v1316 = vsel %vm1081, %v1313, %v1315
    %v1317 = vrot.slane %v1296, 2
    %v1318 = vsel %vm1081, %v1315, %v1317
    %v1319 = vrot.slane %v1297, 2
    %v1320 = vsel %vm1081, %v1317, %v1319
    %v1321 = vrot.slane %v1298, 2
    %v1322 = vsel %vm1081, %v1319, %v1321
    %v1323 = vrot.slane %v1299, 2
    %v1324 = vsel %vm1081, %v1321, %v1323
    %v1325 = vrot.slane %v1300, 2
    %v1326 = vsel %vm1081, %v1323, %v1325
    %1327 = vrot.lane.b32.xlu0 %v1312, 127
    %v1328 = vpop.permute.xlu0 %1327
    %1329 = vrot.lane.b32.xlu0 %v1314, 127
    %v1330 = vpop.permute.xlu0 %1329
    %1331 = vrot.lane.b32.xlu0 %v1316, 127
    %v1332 = vpop.permute.xlu0 %1331
    %1333 = vrot.lane.b32.xlu0 %v1318, 127
    %v1334 = vpop.permute.xlu0 %1333
    %1335 = vrot.lane.b32.xlu0 %v1320, 127
    %v1336 = vpop.permute.xlu0 %1335
    %1337 = vrot.lane.b32.xlu0 %v1322, 127
    %v1338 = vpop.permute.xlu0 %1337
    %1339 = vrot.lane.b32.xlu0 %v1324, 127
    %v1340 = vpop.permute.xlu0 %1339
    %1341 = vrot.lane.b32.xlu0 %v1326, 127
    %v1342 = vpop.permute.xlu0 %1341
    %v1351 = vadd.f32 %v1160, %v1328
    %v1352 = vadd.f32 %v1161, %v1330
    %v1353 = vadd.f32 %v1162, %v1332
    %v1354 = vadd.f32 %v1163, %v1334
    %v1355 = vadd.f32 %v1164, %v1336
    %v1356 = vadd.f32 %v1165, %v1338
    %v1357 = vadd.f32 %v1166, %v1340
    %v1358 = vadd.f32 %v1167, %v1342
    %s1359 = sld [smem:[#allocation3 + $0x19]]
    %v1360 = vstv %s1359
    %v1361 = vmul.f32 %v1360, %v131
    %v1362 = vmul.f32 %v1360, %v109
    %v1363 = vmul.f32 %v1360, %v111
    %v1364 = vmul.f32 %v1360, %v113
    %v1365 = vmul.f32 %v1360, %v115
    %v1366 = vmul.f32 %v1360, %v117
    %v1367 = vmul.f32 %v1360, %v119
    %v1368 = vmul.f32 %v1360, %v121
    %v1369 = vmul.f32 %v1360, %v132
    %v1379 = vrot.slane %v1361, 2
    %v1380 = vrot.slane %v1362, 2
    %v1381 = vsel %vm1081, %v1379, %v1380
    %v1382 = vrot.slane %v1363, 2
    %v1383 = vsel %vm1081, %v1380, %v1382
    %v1384 = vrot.slane %v1364, 2
    %v1385 = vsel %vm1081, %v1382, %v1384
    %v1386 = vrot.slane %v1365, 2
    %v1387 = vsel %vm1081, %v1384, %v1386
    %v1388 = vrot.slane %v1366, 2
    %v1389 = vsel %vm1081, %v1386, %v1388
    %v1390 = vrot.slane %v1367, 2
    %v1391 = vsel %vm1081, %v1388, %v1390
    %v1392 = vrot.slane %v1368, 2
    %v1393 = vsel %vm1081, %v1390, %v1392
    %v1394 = vrot.slane %v1369, 2
    %v1395 = vsel %vm1081, %v1392, %v1394
    %1396 = vrot.lane.b32.xlu0 %v1381, 127
    %v1397 = vpop.permute.xlu0 %1396
    %1398 = vrot.lane.b32.xlu0 %v1383, 127
    %v1399 = vpop.permute.xlu0 %1398
    %1400 = vrot.lane.b32.xlu0 %v1385, 127
    %v1401 = vpop.permute.xlu0 %1400
    %1402 = vrot.lane.b32.xlu0 %v1387, 127
    %v1403 = vpop.permute.xlu0 %1402
    %1404 = vrot.lane.b32.xlu0 %v1389, 127
    %v1405 = vpop.permute.xlu0 %1404
    %1406 = vrot.lane.b32.xlu0 %v1391, 127
    %v1407 = vpop.permute.xlu0 %1406
    %1408 = vrot.lane.b32.xlu0 %v1393, 127
    %v1409 = vpop.permute.xlu0 %1408
    %1410 = vrot.lane.b32.xlu0 %v1395, 127
    %v1411 = vpop.permute.xlu0 %1410
    %v1420 = vadd.f32 %v1213, %v1397
    %v1421 = vadd.f32 %v1214, %v1399
    %v1422 = vadd.f32 %v1215, %v1401
    %v1423 = vadd.f32 %v1216, %v1403
    %v1424 = vadd.f32 %v1217, %v1405
    %v1425 = vadd.f32 %v1218, %v1407
    %v1426 = vadd.f32 %v1219, %v1409
    %v1427 = vadd.f32 %v1220, %v1411
    %s1428 = sld [smem:[#allocation3 + $0x8]]
    %v1429 = vstv %s1428
    %v1430 = vmul.f32 %v1429, %v131
    %v1431 = vmul.f32 %v1429, %v109
    %v1432 = vmul.f32 %v1429, %v111
    %v1433 = vmul.f32 %v1429, %v113
    %v1434 = vmul.f32 %v1429, %v115
    %v1435 = vmul.f32 %v1429, %v117
    %v1436 = vmul.f32 %v1429, %v119
    %v1437 = vmul.f32 %v1429, %v121
    %v1438 = vmul.f32 %v1429, %v132
    %v1448 = vrot.slane %v1430, 2
    %v1449 = vrot.slane %v1431, 2
    %v1450 = vsel %vm1081, %v1448, %v1449
    %v1451 = vrot.slane %v1432, 2
    %v1452 = vsel %vm1081, %v1449, %v1451
    %v1453 = vrot.slane %v1433, 2
    %v1454 = vsel %vm1081, %v1451, %v1453
    %v1455 = vrot.slane %v1434, 2
    %v1456 = vsel %vm1081, %v1453, %v1455
    %v1457 = vrot.slane %v1435, 2
    %v1458 = vsel %vm1081, %v1455, %v1457
    %v1459 = vrot.slane %v1436, 2
    %v1460 = vsel %vm1081, %v1457, %v1459
    %v1461 = vrot.slane %v1437, 2
    %v1462 = vsel %vm1081, %v1459, %v1461
    %v1463 = vrot.slane %v1438, 2
    %v1464 = vsel %vm1081, %v1461, %v1463
    %1465 = vrot.lane.b32.xlu0 %v1450, 126
    %v1466 = vpop.permute.xlu0 %1465
    %1467 = vrot.lane.b32.xlu0 %v1452, 126
    %v1468 = vpop.permute.xlu0 %1467
    %1469 = vrot.lane.b32.xlu0 %v1454, 126
    %v1470 = vpop.permute.xlu0 %1469
    %1471 = vrot.lane.b32.xlu0 %v1456, 126
    %v1472 = vpop.permute.xlu0 %1471
    %1473 = vrot.lane.b32.xlu0 %v1458, 126
    %v1474 = vpop.permute.xlu0 %1473
    %1475 = vrot.lane.b32.xlu0 %v1460, 126
    %v1476 = vpop.permute.xlu0 %1475
    %1477 = vrot.lane.b32.xlu0 %v1462, 126
    %v1478 = vpop.permute.xlu0 %1477
    %1479 = vrot.lane.b32.xlu0 %v1464, 126
    %v1480 = vpop.permute.xlu0 %1479
    %v1489 = vadd.f32 %v1282, %v1466
    %v1490 = vadd.f32 %v1283, %v1468
    %v1491 = vadd.f32 %v1284, %v1470
    %v1492 = vadd.f32 %v1285, %v1472
    %v1493 = vadd.f32 %v1286, %v1474
    %v1494 = vadd.f32 %v1287, %v1476
    %v1495 = vadd.f32 %v1288, %v1478
    %v1496 = vadd.f32 %v1289, %v1480
    %s1497 = sld [smem:[#allocation3 + $0x11]]
    %v1498 = vstv %s1497
    %v1499 = vmul.f32 %v1498, %v131
    %v1500 = vmul.f32 %v1498, %v109
    %v1501 = vmul.f32 %v1498, %v111
    %v1502 = vmul.f32 %v1498, %v113
    %v1503 = vmul.f32 %v1498, %v115
    %v1504 = vmul.f32 %v1498, %v117
    %v1505 = vmul.f32 %v1498, %v119
    %v1506 = vmul.f32 %v1498, %v121
    %v1507 = vmul.f32 %v1498, %v132
    %v1517 = vrot.slane %v1499, 2
    %v1518 = vrot.slane %v1500, 2
    %v1519 = vsel %vm1081, %v1517, %v1518
    %v1520 = vrot.slane %v1501, 2
    %v1521 = vsel %vm1081, %v1518, %v1520
    %v1522 = vrot.slane %v1502, 2
    %v1523 = vsel %vm1081, %v1520, %v1522
    %v1524 = vrot.slane %v1503, 2
    %v1525 = vsel %vm1081, %v1522, %v1524
    %v1526 = vrot.slane %v1504, 2
    %v1527 = vsel %vm1081, %v1524, %v1526
    %v1528 = vrot.slane %v1505, 2
    %v1529 = vsel %vm1081, %v1526, %v1528
    %v1530 = vrot.slane %v1506, 2
    %v1531 = vsel %vm1081, %v1528, %v1530
    %v1532 = vrot.slane %v1507, 2
    %v1533 = vsel %vm1081, %v1530, %v1532
    %1534 = vrot.lane.b32.xlu0 %v1519, 126
    %v1535 = vpop.permute.xlu0 %1534
    %1536 = vrot.lane.b32.xlu0 %v1521, 126
    %v1537 = vpop.permute.xlu0 %1536
    %1538 = vrot.lane.b32.xlu0 %v1523, 126
    %v1539 = vpop.permute.xlu0 %1538
    %1540 = vrot.lane.b32.xlu0 %v1525, 126
    %v1541 = vpop.permute.xlu0 %1540
    %1542 = vrot.lane.b32.xlu0 %v1527, 126
    %v1543 = vpop.permute.xlu0 %1542
    %1544 = vrot.lane.b32.xlu0 %v1529, 126
    %v1545 = vpop.permute.xlu0 %1544
    %1546 = vrot.lane.b32.xlu0 %v1531, 126
    %v1547 = vpop.permute.xlu0 %1546
    %1548 = vrot.lane.b32.xlu0 %v1533, 126
    %v1549 = vpop.permute.xlu0 %1548
    %v1558 = vadd.f32 %v1351, %v1535
    %v1559 = vadd.f32 %v1352, %v1537
    %v1560 = vadd.f32 %v1353, %v1539
    %v1561 = vadd.f32 %v1354, %v1541
    %v1562 = vadd.f32 %v1355, %v1543
    %v1563 = vadd.f32 %v1356, %v1545
    %v1564 = vadd.f32 %v1357, %v1547
    %v1565 = vadd.f32 %v1358, %v1549
    %s1566 = sld [smem:[#allocation3 + $0x1a]]
    %v1567 = vstv %s1566
    %v1568 = vmul.f32 %v1567, %v131
    %v1569 = vmul.f32 %v1567, %v109
    %v1570 = vmul.f32 %v1567, %v111
    %v1571 = vmul.f32 %v1567, %v113
    %v1572 = vmul.f32 %v1567, %v115
    %v1573 = vmul.f32 %v1567, %v117
    %v1574 = vmul.f32 %v1567, %v119
    %v1575 = vmul.f32 %v1567, %v121
    %v1576 = vmul.f32 %v1567, %v132
    %v1586 = vrot.slane %v1568, 2
    %v1587 = vrot.slane %v1569, 2
    %v1588 = vsel %vm1081, %v1586, %v1587
    %v1589 = vrot.slane %v1570, 2
    %v1590 = vsel %vm1081, %v1587, %v1589
    %v1591 = vrot.slane %v1571, 2
    %v1592 = vsel %vm1081, %v1589, %v1591
    %v1593 = vrot.slane %v1572, 2
    %v1594 = vsel %vm1081, %v1591, %v1593
    %v1595 = vrot.slane %v1573, 2
    %v1596 = vsel %vm1081, %v1593, %v1595
    %v1597 = vrot.slane %v1574, 2
    %v1598 = vsel %vm1081, %v1595, %v1597
    %v1599 = vrot.slane %v1575, 2
    %v1600 = vsel %vm1081, %v1597, %v1599
    %v1601 = vrot.slane %v1576, 2
    %v1602 = vsel %vm1081, %v1599, %v1601
    %1603 = vrot.lane.b32.xlu0 %v1588, 126
    %v1604 = vpop.permute.xlu0 %1603
    %1605 = vrot.lane.b32.xlu0 %v1590, 126
    %v1606 = vpop.permute.xlu0 %1605
    %1607 = vrot.lane.b32.xlu0 %v1592, 126
    %v1608 = vpop.permute.xlu0 %1607
    %1609 = vrot.lane.b32.xlu0 %v1594, 126
    %v1610 = vpop.permute.xlu0 %1609
    %1611 = vrot.lane.b32.xlu0 %v1596, 126
    %v1612 = vpop.permute.xlu0 %1611
    %1613 = vrot.lane.b32.xlu0 %v1598, 126
    %v1614 = vpop.permute.xlu0 %1613
    %1615 = vrot.lane.b32.xlu0 %v1600, 126
    %v1616 = vpop.permute.xlu0 %1615
    %1617 = vrot.lane.b32.xlu0 %v1602, 126
    %v1618 = vpop.permute.xlu0 %1617
    %v1627 = vadd.f32 %v1420, %v1604
    %v1628 = vadd.f32 %v1421, %v1606
    %v1629 = vadd.f32 %v1422, %v1608
    %v1630 = vadd.f32 %v1423, %v1610
    %v1631 = vadd.f32 %v1424, %v1612
    %v1632 = vadd.f32 %v1425, %v1614
    %v1633 = vadd.f32 %v1426, %v1616
    %v1634 = vadd.f32 %v1427, %v1618
    %s1635 = sld [smem:[#allocation4]]
    %v1636 = vstv %s1635
    %v1637 = vadd.f32 %v1489, %v1636
    %v1638 = vadd.f32 %v1490, %v1636
    %v1639 = vadd.f32 %v1491, %v1636
    %v1640 = vadd.f32 %v1492, %v1636
    %v1641 = vadd.f32 %v1493, %v1636
    %v1642 = vadd.f32 %v1494, %v1636
    %v1643 = vadd.f32 %v1495, %v1636
    %v1644 = vadd.f32 %v1496, %v1636
    %v1645 = vtanh.pop %v1637
    %v1646 = vtanh.pop %v1638
    %v1647 = vtanh.pop %v1639
    %v1648 = vtanh.pop %v1640
    %v1649 = vtanh.pop %v1641
    %v1650 = vtanh.pop %v1642
    %v1651 = vtanh.pop %v1643
    %v1652 = vtanh.pop %v1644
    %vm1653 = vcmask 523264
    %1654 = vst.msk [vmem:[#allocation8] sm:$0xff] %vm1653, %v1645
    %1655 = vst.msk [vmem:[#allocation8 + $0x8] sm:$0xff] %vm1653, %v1646
    %1656 = vst.msk [vmem:[#allocation8 + $0x10] sm:$0xff] %vm1653, %v1647
    %1657 = vst.msk [vmem:[#allocation8 + $0x18] sm:$0xff] %vm1653, %v1648
    %1658 = vst.msk [vmem:[#allocation8 + $0x20] sm:$0xff] %vm1653, %v1649
    %1659 = vst.msk [vmem:[#allocation8 + $0x28] sm:$0xff] %vm1653, %v1650
    %1660 = vst.msk [vmem:[#allocation8 + $0x30] sm:$0xff] %vm1653, %v1651
    %1661 = vst.msk [vmem:[#allocation8 + $0x38] sm:$0xff] %vm1653, %v1652
    %s1662 = sld [smem:[#allocation4 + $0x1]]
    %v1663 = vstv %s1662
    %v1664 = vadd.f32 %v1558, %v1663
    %v1665 = vadd.f32 %v1559, %v1663
    %v1666 = vadd.f32 %v1560, %v1663
    %v1667 = vadd.f32 %v1561, %v1663
    %v1668 = vadd.f32 %v1562, %v1663
    %v1669 = vadd.f32 %v1563, %v1663
    %v1670 = vadd.f32 %v1564, %v1663
    %v1671 = vadd.f32 %v1565, %v1663
    %v1672 = vtanh.pop %v1664
    %v1673 = vtanh.pop %v1665
    %v1674 = vtanh.pop %v1666
    %v1675 = vtanh.pop %v1667
    %v1676 = vtanh.pop %v1668
    %v1677 = vtanh.pop %v1669
    %v1678 = vtanh.pop %v1670
    %v1679 = vtanh.pop %v1671
    %s1680 = scalar_lea.vmem [#allocation8], 64
    %1681 = vst.msk [vmem:[%s1680] sm:$0xff] %vm1653, %v1672
    %1682 = vst.msk [vmem:[%s1680 + $0x8] sm:$0xff] %vm1653, %v1673
    %1683 = vst.msk [vmem:[%s1680 + $0x10] sm:$0xff] %vm1653, %v1674
    %1684 = vst.msk [vmem:[%s1680 + $0x18] sm:$0xff] %vm1653, %v1675
    %1685 = vst.msk [vmem:[%s1680 + $0x20] sm:$0xff] %vm1653, %v1676
    %1686 = vst.msk [vmem:[%s1680 + $0x28] sm:$0xff] %vm1653, %v1677
    %1687 = vst.msk [vmem:[%s1680 + $0x30] sm:$0xff] %vm1653, %v1678
    %1688 = vst.msk [vmem:[%s1680 + $0x38] sm:$0xff] %vm1653, %v1679
    %s1689 = sld [smem:[#allocation4 + $0x2]]
    %v1690 = vstv %s1689
    %v1691 = vadd.f32 %v1627, %v1690
    %v1692 = vadd.f32 %v1628, %v1690
    %v1693 = vadd.f32 %v1629, %v1690
    %v1694 = vadd.f32 %v1630, %v1690
    %v1695 = vadd.f32 %v1631, %v1690
    %v1696 = vadd.f32 %v1632, %v1690
    %v1697 = vadd.f32 %v1633, %v1690
    %v1698 = vadd.f32 %v1634, %v1690
    %v1699 = vtanh.pop %v1691
    %v1700 = vtanh.pop %v1692
    %v1701 = vtanh.pop %v1693
    %v1702 = vtanh.pop %v1694
    %v1703 = vtanh.pop %v1695
    %v1704 = vtanh.pop %v1696
    %v1705 = vtanh.pop %v1697
    %v1706 = vtanh.pop %v1698
    %s1707 = scalar_lea.vmem [#allocation8], 128
    %1708 = vst.msk [vmem:[%s1707] sm:$0xff] %vm1653, %v1699
    %1709 = vst.msk [vmem:[%s1707 + $0x8] sm:$0xff] %vm1653, %v1700
    %1710 = vst.msk [vmem:[%s1707 + $0x10] sm:$0xff] %vm1653, %v1701
    %1711 = vst.msk [vmem:[%s1707 + $0x18] sm:$0xff] %vm1653, %v1702
    %1712 = vst.msk [vmem:[%s1707 + $0x20] sm:$0xff] %vm1653, %v1703
    %1713 = vst.msk [vmem:[%s1707 + $0x28] sm:$0xff] %vm1653, %v1704
    %1714 = vst.msk [vmem:[%s1707 + $0x30] sm:$0xff] %vm1653, %v1705
    %1715 = vst.msk [vmem:[%s1707 + $0x38] sm:$0xff] %vm1653, %v1706
    // Predicated region
    $region10: #{tpu_custom_call.1} parent=1 // pred_check
      _
    $region11: #{tpu_custom_call.1} parent=1 // pred_check_branch
      %1717 = sbr.rel (0) target = $region13
    $region12: #{tpu_custom_call.1} parent=1 // pred_region
      %1719 = vsyncadd [#allocation7], 0
      %s1720 = sshll.u32 [#allocation8], 4
      %s1721 = int_to_ptr.vmem [resolvable:$true] %s1720
      %s1722 = sshll.u32 %s3, 4
      %s1723 = int_to_ptr.hbm [resolvable:$true] %s1722
      %1728 = dma.vmem_to_hbm [thread:$0]  %s1721, 3072, %s1723, [#allocation7], 128, 128, 8
    $region13: #{tpu_custom_call.1} parent=1 // pred_fallthru
      _
    // Predicated region
    $region14: #{tpu_custom_call.1} parent=1 // pred_check
      _
    $region15: #{tpu_custom_call.1} parent=1 // pred_check_branch
      %1730 = sbr.rel (0) target = $region17
    $region16: #{tpu_custom_call.1} parent=1 // pred_region
      %1732 = dma.done [#allocation7], 3072
    $region17: #{tpu_custom_call.1} parent=1 // pred_fallthru
      _
    %1733 = vsyncpa [#allocation6], 1
    %1734 = vsyncpa [#allocation7], 1

</llo_original>
